<compile_context>
chip_gen: v5e
topology: v5e:2x2
jax: 0.10.0
libtpu: 0.0.40
codegen_flags: <defaults>
</compile_context>

<pallas_src>
import functools

import jax
import jax.numpy as jnp
from jax.experimental import pallas as pl
from jax.experimental.pallas import tpu as pltpu


# featurize=True branch of the PyTorch module: a pure slice of s2, done in the
# wrapper (layout only, nothing to gain from putting it in the kernel).
_FEATURIZER = {
    "hopper": lambda s: s[:, -3:],
    "fetch": lambda s: s[:, 0:3],
    "fetch_push": lambda s: s[:, 3:5],
    "finger": lambda s: s[:, 0:3],
    "half_cheetah": lambda s: s[:, -3:],
    "hand": lambda s: s[:, 48:],
}


def _round_up(x, m):
    return (x + m - 1) // m * m


def _cdiv(a, b):
    return (a + b - 1) // b


def _measure_kernel(xt_ref, w1t_ref, b1_ref, w2_ref, b2_ref, o_ref):
    # hT = relu(W1^T @ x^T + b1): one K=d_in MXU matmul per tile; result is
    # [H, TB] with the batch on the lane axis.
    ht = jnp.dot(w1t_ref[...], xt_ref[...], preferred_element_type=jnp.float32)
    ht = jnp.maximum(ht + b1_ref[...], 0.0)                    # [H, TB]
    # 256 -> 1 head as a VPU multiply + sublane (XLU) reduction; lands as a
    # lane-dense [1, TB] row, so sigmoid and the store run at full lane width.
    y = jnp.sum(ht * w2_ref[...], axis=0, keepdims=True) + b2_ref[...]
    o_ref[...] = jax.nn.sigmoid(y) * (1.0 - 0.001)             # [1, TB]


@functools.partial(jax.jit, static_argnames=("tile_b",))
def _measure_forward(s1, a1, s2, z, w1, b1, w2, b2, *, tile_b=2048):
    f32 = jnp.float32
    B = s1.shape[0]
    d_in = w1.shape[0]
    H = w1.shape[1]                                            # 256

    # Pack the four streams once in the wrapper and present them transposed
    # ([d_in, B]) so the batch is the lane axis: one lane-dense DMA per grid
    # step instead of four skinny (tb, d<=11) tiles.
    x = jnp.concatenate(
        [s1.astype(f32), a1.astype(f32), s2.astype(f32), z.astype(f32)], axis=1)
    assert x.shape[1] == d_in, (x.shape, d_in)
    xt = x.T                                                   # [d_in, B]

    w1t = w1.astype(f32).T                                     # [H, d_in]
    b1_col = b1.astype(f32).reshape(H, 1)
    w2_col = w2.astype(f32).reshape(H, 1)
    b2_sc = b2.astype(f32).reshape(1, 1)

    # Batch tiling: ~tile_b rows per step, batch on the lane axis (tiles are
    # multiples of 128).  Non-trivial batches get an even number of >= 2
    # steps so v7x's two TensorCores split the "parallel" axis.
    tile_b = max(128, _round_up(int(tile_b), 128))
    if B <= 256:
        n_steps = 1
        tb = _round_up(max(B, 1), 128)
    else:
        n_steps = _cdiv(B, tile_b)
        n_steps += n_steps % 2                                 # round up to even
        tb = _round_up(_cdiv(B, n_steps), 128)
    b_pad = n_steps * tb
    if b_pad != B:
        xt = jnp.pad(xt, ((0, 0), (0, b_pad - B)))

    cost = pl.CostEstimate(
        flops=2 * b_pad * d_in * H + 2 * b_pad * H,
        transcendentals=b_pad,                                 # sigmoid
        bytes_accessed=4 * (b_pad * d_in + d_in * H + 2 * H + 1 + b_pad),
    )

    out = pl.pallas_call(
        _measure_kernel,
        out_shape=jax.ShapeDtypeStruct((1, b_pad), f32),
        grid=(n_steps,),
        in_specs=[
            pl.BlockSpec((d_in, tb), lambda i: (0, i)),        # x^T tile (streamed)
            pl.BlockSpec((H, d_in), lambda i: (0, 0)),         # W1^T (VMEM-resident)
            pl.BlockSpec((H, 1), lambda i: (0, 0)),            # b1 column
            pl.BlockSpec((H, 1), lambda i: (0, 0)),            # w2 column
            pl.BlockSpec((1, 1), lambda i: (0, 0)),            # b2
        ],
        out_specs=pl.BlockSpec((1, tb), lambda i: (0, i)),
        compiler_params=pltpu.CompilerParams(
            dimension_semantics=("parallel",),                 # v7x: shard batch over 2 TCs
        ),
        cost_estimate=cost,
    )(xt, w1t, b1_col, w2_col, b2_sc)

    return out[0, :B].reshape(B, 1)


def measure_network_forward(s1, a1, s2, z, w1, b1, w2, b2,
                            *, env_name="hopper", featurize=False, tile_b=2048):
    """Full MeasureNetwork.forward. featurize=True applies the env-specific
    slice of s2 before the kernel (pure indexing, stays in the wrapper)."""
    if featurize:
        s2 = _FEATURIZER[env_name](s2)
    return _measure_forward(s1, a1, s2, z, w1, b1, w2, b2, tile_b=tile_b)


def init_params(key, in_dim, hidden=256, out_dim=1):
    # torch.nn.Linear default init: U(-1/sqrt(fan_in), 1/sqrt(fan_in)).
    k1, k2, k3, k4 = jax.random.split(key, 4)
    bound1 = 1.0 / jnp.sqrt(in_dim)
    bound2 = 1.0 / jnp.sqrt(hidden)
    w1 = jax.random.uniform(k1, (in_dim, hidden), jnp.float32, -bound1, bound1)
    b1 = jax.random.uniform(k2, (hidden,), jnp.float32, -bound1, bound1)
    w2 = jax.random.uniform(k3, (hidden, out_dim), jnp.float32, -bound2, bound2)
    b2 = jax.random.uniform(k4, (out_dim,), jnp.float32, -bound2, bound2)
    return w1, b1, w2, b2


def _reference(s1, a1, s2, z, w1, b1, w2, b2):
    x = jnp.concatenate([s1, a1, s2, z], axis=1)
    h = jnp.maximum(jnp.dot(x, w1, precision=jax.lax.Precision.HIGHEST) + b1, 0.0)
    y = jnp.dot(h, w2, precision=jax.lax.Precision.HIGHEST) + b2
    return jax.nn.sigmoid(y) * (1.0 - 0.001)


if __name__ == "__main__":
    # Shapes implied by the module (env='hopper', featurize=False):
    # s1, s2: [B, state_dim], a1: [B, action_dim], z: [B, z_dim].
    state_dim, action_dim, z_dim = 11, 3, 4
    in_dim = state_dim + action_dim + state_dim + z_dim        # 29

    key = jax.random.PRNGKey(0)
    kw, kd = jax.random.split(key)
    w1, b1, w2, b2 = init_params(kw, in_dim)

    ok = True
    # batch=4: tiny single-step path; batch=300: even 2-step grid + padding path.
    for batch in (4, 300):
        kb = jax.random.split(jax.random.fold_in(kd, batch), 4)
        s1 = jax.random.normal(kb[0], (batch, state_dim), jnp.float32)
        a1 = jax.random.normal(kb[1], (batch, action_dim), jnp.float32)
        s2 = jax.random.normal(kb[2], (batch, state_dim), jnp.float32)
        z = jax.random.normal(kb[3], (batch, z_dim), jnp.float32)

        out = measure_network_forward(s1, a1, s2, z, w1, b1, w2, b2)
        out = jax.block_until_ready(out)

        ref = _reference(s1, a1, s2, z, w1, b1, w2, b2)
        ok &= out.shape == (batch, 1)
        # Tolerance allows for differing MXU f32 pass counts between the
        # in-kernel dot and XLA's reference matmul on TPU.
        ok &= bool(jnp.allclose(out, ref, atol=2e-3, rtol=2e-3))

    assert ok
    print("KERNEL_OK")
</pallas_src>

<mosaic_0001>
module attributes {stable_mosaic.version = 11 : i64} {
  func.func @_measure_kernel(%arg0: i32, %arg1: memref<29x128xf32, #tpu.memory_space<vmem>>, %arg2: memref<256x29xf32, #tpu.memory_space<vmem>>, %arg3: memref<256x1xf32, #tpu.memory_space<vmem>>, %arg4: memref<256x1xf32, #tpu.memory_space<vmem>>, %arg5: memref<1x1xf32, #tpu.memory_space<vmem>>, %arg6: memref<1x128xf32, #tpu.memory_space<vmem>>) attributes {dimension_semantics = [#tpu.dimension_semantics<parallel>], iteration_bounds = array<i64: 1>, scalar_prefetch = 0 : i64, scratch_operands = 0 : i64, tpu.core_type = #tpu.core_type<tc>, window_params = [{transform_indices = @transform_0, window_bounds = array<i64: 29, 128>}, {pipeline_mode = #tpu.pipeline_mode<synchronous>, transform_indices = @transform_1, window_bounds = array<i64: 256, 29>}, {pipeline_mode = #tpu.pipeline_mode<synchronous>, transform_indices = @transform_2, window_bounds = array<i64: 256, 1>}, {pipeline_mode = #tpu.pipeline_mode<synchronous>, transform_indices = @transform_3, window_bounds = array<i64: 256, 1>}, {pipeline_mode = #tpu.pipeline_mode<synchronous>, transform_indices = @transform_4, window_bounds = array<i64: 1, 1>}, {transform_indices = @transform_5, window_bounds = array<i64: 1, 128>}]} {
    %c0 = arith.constant 0 : index
    %c0_0 = arith.constant 0 : index
    %0 = vector.load %arg2[%c0, %c0_0] : memref<256x29xf32, #tpu.memory_space<vmem>>, vector<256x29xf32>
    %c0_1 = arith.constant 0 : index
    %c0_2 = arith.constant 0 : index
    %1 = vector.load %arg1[%c0_1, %c0_2] : memref<29x128xf32, #tpu.memory_space<vmem>>, vector<29x128xf32>
    %cst = arith.constant dense<0.000000e+00> : vector<256x128xf32>
    %2 = tpu.matmul %0, %1, %cst {dimension_numbers = #tpu.dot_dimension_numbers<[1], [0], [0], [1], [0, 0, 1, 1], [], []>} : vector<256x29xf32>, vector<29x128xf32>, vector<256x128xf32> -> vector<256x128xf32>
    %c0_3 = arith.constant 0 : index
    %c0_4 = arith.constant 0 : index
    %3 = vector.load %arg3[%c0_3, %c0_4] : memref<256x1xf32, #tpu.memory_space<vmem>>, vector<256x1xf32>
    %4 = vector.broadcast %3 : vector<256x1xf32> to vector<256x128xf32>
    %5 = arith.addf %2, %4 : vector<256x128xf32>
    %cst_5 = arith.constant 0.000000e+00 : f32
    %6 = vector.broadcast %cst_5 : f32 to vector<256x128xf32>
    %7 = arith.maximumf %5, %6 : vector<256x128xf32>
    %c0_6 = arith.constant 0 : index
    %c0_7 = arith.constant 0 : index
    %8 = vector.load %arg4[%c0_6, %c0_7] : memref<256x1xf32, #tpu.memory_space<vmem>>, vector<256x1xf32>
    %9 = vector.broadcast %8 : vector<256x1xf32> to vector<256x128xf32>
    %10 = arith.mulf %7, %9 : vector<256x128xf32>
    %cst_8 = arith.constant dense<0.000000e+00> : vector<128xf32>
    %11 = vector.multi_reduction <add>, %10, %cst_8 [0] : vector<256x128xf32> to vector<128xf32>
    %12 = vector.shape_cast %11 : vector<128xf32> to vector<1x128xf32>
    %c0_9 = arith.constant 0 : index
    %c0_10 = arith.constant 0 : index
    %13 = vector.load %arg5[%c0_9, %c0_10] : memref<1x1xf32, #tpu.memory_space<vmem>>, vector<1x1xf32>
    %14 = vector.broadcast %13 : vector<1x1xf32> to vector<1x128xf32>
    %15 = arith.addf %12, %14 : vector<1x128xf32>
    %16 = arith.negf %15 : vector<1x128xf32>
    %17 = math.exp %16 : vector<1x128xf32>
    %cst_11 = arith.constant 1.000000e+00 : f32
    %18 = vector.broadcast %cst_11 : f32 to vector<1x128xf32>
    %19 = arith.addf %18, %17 : vector<1x128xf32>
    %20 = arith.divf %18, %19 : vector<1x128xf32>
    %cst_12 = arith.constant 9.990000e-01 : f32
    %21 = vector.broadcast %cst_12 : f32 to vector<1x128xf32>
    %22 = arith.mulf %20, %21 : vector<1x128xf32>
    %c0_13 = arith.constant 0 : index
    %c0_14 = arith.constant 0 : index
    %23 = vector.load %arg6[%c0_13, %c0_14] : memref<1x128xf32, #tpu.memory_space<vmem>>, vector<1x128xf32>
    tpu.vector_store %arg6[%c0_13, %c0_14], %22 {strides = array<i32>} : memref<1x128xf32, #tpu.memory_space<vmem>>, vector<1x128xf32>,
    return
  }
  func.func @transform_0(%arg0: i32) -> (i32, i32) {
    %c0_i32 = arith.constant 0 : i32
    %c0_i32_0 = arith.constant 0 : i32
    return %c0_i32, %arg0 : i32, i32
  }
  func.func @transform_1(%arg0: i32) -> (i32, i32) {
    %c0_i32 = arith.constant 0 : i32
    %c0_i32_0 = arith.constant 0 : i32
    %c0_i32_1 = arith.constant 0 : i32
    return %c0_i32, %c0_i32_0 : i32, i32
  }
  func.func @transform_2(%arg0: i32) -> (i32, i32) {
    %c0_i32 = arith.constant 0 : i32
    %c0_i32_0 = arith.constant 0 : i32
    %c0_i32_1 = arith.constant 0 : i32
    return %c0_i32, %c0_i32_0 : i32, i32
  }
  func.func @transform_3(%arg0: i32) -> (i32, i32) {
    %c0_i32 = arith.constant 0 : i32
    %c0_i32_0 = arith.constant 0 : i32
    %c0_i32_1 = arith.constant 0 : i32
    return %c0_i32, %c0_i32_0 : i32, i32
  }
  func.func @transform_4(%arg0: i32) -> (i32, i32) {
    %c0_i32 = arith.constant 0 : i32
    %c0_i32_0 = arith.constant 0 : i32
    %c0_i32_1 = arith.constant 0 : i32
    return %c0_i32, %c0_i32_0 : i32, i32
  }
  func.func @transform_5(%arg0: i32) -> (i32, i32) {
    %c0_i32 = arith.constant 0 : i32
    %c0_i32_0 = arith.constant 0 : i32
    return %c0_i32, %arg0 : i32, i32
  }
}

</mosaic_0001>

<llo_original>
// kernel: _measure_forward.1
$region0: #{_measure_forward.1}
  #allocation0 [shape = 'u32[]', space=smem, size = 0x4, offset = 0x4, fixed_abs, tag = 'smem constant byte address 0x4 - core index']
  #allocation1 [shape = 'u32[72,128]{1,0:T(1,128)}', space=vmem, size = 0x9000, scoped, tag = 'internal scratch']
  #allocation2 [shape = 'f32[1,1]{1,0:T(1,128)S(1)}', space=vmem, size = 0x200, scoped, tag = 'scoped memory for _measure_forward.1']
  %s0 = inlined_call_operand.vmem [shape: f32[29,128], index: 0, kind: input, shape index: {}]
  %s1 = inlined_call_operand.vmem [shape: f32[256,29], index: 1, kind: input, shape index: {}]
  %s2 = inlined_call_operand.vmem [shape: f32[256,1], index: 2, kind: input, shape index: {}]
  %s3 = inlined_call_operand.vmem [shape: f32[256,1], index: 3, kind: input, shape index: {}]
  %s4 = inlined_call_operand.<no memory space> [shape: f32[1,1], index: 4, kind: input, shape index: {}]
  %s5 = inlined_call_operand.vmem [shape: f32[1,128], index: 5, kind: output, shape index: {}]
  %s6 = sld [smem:[#allocation0]]
  $region30: #{_measure_forward.1} parent=0
    _
  %s8 = ssub.s32 1, %s6
  %s9 = scalar_select 0, %s8, %s6
  %v10 = vstv %s4
  %11 = vst [vmem:[#allocation2] sm:$0x1] %v10
  // Predicated region
  $region2: #{_measure_forward.1} parent=0 // pred_check
    _
  $region3: #{_measure_forward.1} parent=0 // pred_check_branch
    %13 = sbr.rel (0) target = $region5
  $region4: #{_measure_forward.1} parent=0 // pred_region
    _
  $region5: #{_measure_forward.1} parent=0 // pred_fallthru
    _
  // Predicated region
  $region6: #{_measure_forward.1} parent=0 // pred_check
    _
  $region7: #{_measure_forward.1} parent=0 // pred_check_branch
    %15 = sbr.rel (0) target = $region9
  $region8: #{_measure_forward.1} parent=0 // pred_region
    _
  $region9: #{_measure_forward.1} parent=0 // pred_fallthru
    _
  // Predicated region
  $region10: #{_measure_forward.1} parent=0 // pred_check
    _
  $region11: #{_measure_forward.1} parent=0 // pred_check_branch
    %17 = sbr.rel (0) target = $region13
  $region12: #{_measure_forward.1} parent=0 // pred_region
    _
  $region13: #{_measure_forward.1} parent=0 // pred_fallthru
    _
  // Predicated region
  $region14: #{_measure_forward.1} parent=0 // pred_check
    _
  $region15: #{_measure_forward.1} parent=0 // pred_check_branch
    %19 = sbr.rel (0) target = $region17
  $region16: #{_measure_forward.1} parent=0 // pred_region
    _
  $region17: #{_measure_forward.1} parent=0 // pred_fallthru
    _
  // Predicated region
  $region18: #{_measure_forward.1} parent=0 // pred_check
    _
  $region19: #{_measure_forward.1} parent=0 // pred_check_branch
    %21 = sbr.rel (0) target = $region21
  $region20: #{_measure_forward.1} parent=0 // pred_region
    _
  $region21: #{_measure_forward.1} parent=0 // pred_fallthru
    _
  %v22 = vld [vmem:[%s1] sm:$0xff]
  %v23 = vld [vmem:[%s1 + $0x8] sm:$0xff]
  %v24 = vld [vmem:[%s1 + $0x10] sm:$0xff]
  %v25 = vld [vmem:[%s1 + $0x18] sm:$0xff]
  %v26 = vld [vmem:[%s1 + $0x20] sm:$0xff]
  %v27 = vld [vmem:[%s1 + $0x28] sm:$0xff]
  %v28 = vld [vmem:[%s1 + $0x30] sm:$0xff]
  %v29 = vld [vmem:[%s1 + $0x38] sm:$0xff]
  %v30 = vld [vmem:[%s1 + $0x40] sm:$0xff]
  %v31 = vld [vmem:[%s1 + $0x48] sm:$0xff]
  %v32 = vld [vmem:[%s1 + $0x50] sm:$0xff]
  %v33 = vld [vmem:[%s1 + $0x58] sm:$0xff]
  %v34 = vld [vmem:[%s1 + $0x60] sm:$0xff]
  %v35 = vld [vmem:[%s1 + $0x68] sm:$0xff]
  %v36 = vld [vmem:[%s1 + $0x70] sm:$0xff]
  %v37 = vld [vmem:[%s1 + $0x78] sm:$0xff]
  %v38 = vld [vmem:[%s1 + $0x80] sm:$0xff]
  %v39 = vld [vmem:[%s1 + $0x88] sm:$0xff]
  %v40 = vld [vmem:[%s1 + $0x90] sm:$0xff]
  %v41 = vld [vmem:[%s1 + $0x98] sm:$0xff]
  %v42 = vld [vmem:[%s1 + $0xa0] sm:$0xff]
  %v43 = vld [vmem:[%s1 + $0xa8] sm:$0xff]
  %v44 = vld [vmem:[%s1 + $0xb0] sm:$0xff]
  %v45 = vld [vmem:[%s1 + $0xb8] sm:$0xff]
  %v46 = vld [vmem:[%s1 + $0xc0] sm:$0xff]
  %v47 = vld [vmem:[%s1 + $0xc8] sm:$0xff]
  %v48 = vld [vmem:[%s1 + $0xd0] sm:$0xff]
  %v49 = vld [vmem:[%s1 + $0xd8] sm:$0xff]
  %v50 = vld [vmem:[%s1 + $0xe0] sm:$0xff]
  %v51 = vld [vmem:[%s1 + $0xe8] sm:$0xff]
  %v52 = vld [vmem:[%s1 + $0xf0] sm:$0xff]
  %v53 = vld [vmem:[%s1 + $0xf8] sm:$0xff]
  %v54 = vld [vmem:[%s0] sm:$0xff]
  %v55 = vld [vmem:[%s0 + $0x8] sm:$0xff]
  %v56 = vld [vmem:[%s0 + $0x10] sm:$0xff]
  %v57 = vld [vmem:[%s0 + $0x18] sm:$0x1f]
  %v58 = vld [vmem:[%s2] sm:$0xff]
  %v59 = vld [vmem:[%s2 + $0x8] sm:$0xff]
  %v60 = vld [vmem:[%s2 + $0x10] sm:$0xff]
  %v61 = vld [vmem:[%s2 + $0x18] sm:$0xff]
  %v62 = vld [vmem:[%s2 + $0x20] sm:$0xff]
  %v63 = vld [vmem:[%s2 + $0x28] sm:$0xff]
  %v64 = vld [vmem:[%s2 + $0x30] sm:$0xff]
  %v65 = vld [vmem:[%s2 + $0x38] sm:$0xff]
  %v66 = vld [vmem:[%s2 + $0x40] sm:$0xff]
  %v67 = vld [vmem:[%s2 + $0x48] sm:$0xff]
  %v68 = vld [vmem:[%s2 + $0x50] sm:$0xff]
  %v69 = vld [vmem:[%s2 + $0x58] sm:$0xff]
  %v70 = vld [vmem:[%s2 + $0x60] sm:$0xff]
  %v71 = vld [vmem:[%s2 + $0x68] sm:$0xff]
  %v72 = vld [vmem:[%s2 + $0x70] sm:$0xff]
  %v73 = vld [vmem:[%s2 + $0x78] sm:$0xff]
  %v74 = vld [vmem:[%s2 + $0x80] sm:$0xff]
  %v75 = vld [vmem:[%s2 + $0x88] sm:$0xff]
  %v76 = vld [vmem:[%s2 + $0x90] sm:$0xff]
  %v77 = vld [vmem:[%s2 + $0x98] sm:$0xff]
  %v78 = vld [vmem:[%s2 + $0xa0] sm:$0xff]
  %v79 = vld [vmem:[%s2 + $0xa8] sm:$0xff]
  %v80 = vld [vmem:[%s2 + $0xb0] sm:$0xff]
  %v81 = vld [vmem:[%s2 + $0xb8] sm:$0xff]
  %v82 = vld [vmem:[%s2 + $0xc0] sm:$0xff]
  %v83 = vld [vmem:[%s2 + $0xc8] sm:$0xff]
  %v84 = vld [vmem:[%s2 + $0xd0] sm:$0xff]
  %v85 = vld [vmem:[%s2 + $0xd8] sm:$0xff]
  %v86 = vld [vmem:[%s2 + $0xe0] sm:$0xff]
  %v87 = vld [vmem:[%s2 + $0xe8] sm:$0xff]
  %v88 = vld [vmem:[%s2 + $0xf0] sm:$0xff]
  %v89 = vld [vmem:[%s2 + $0xf8] sm:$0xff]
  %91 = vset.pattern.permute.xlu0 0
  %92 = vperm.xlu0 %91, %v58
  %v93 = vpop.permute.xlu0 %92
  %96 = vset.pattern.permute.xlu0 0
  %97 = vperm.xlu0 %96, %v59
  %v98 = vpop.permute.xlu0 %97
  %101 = vset.pattern.permute.xlu0 0
  %102 = vperm.xlu0 %101, %v60
  %v103 = vpop.permute.xlu0 %102
  %106 = vset.pattern.permute.xlu0 0
  %107 = vperm.xlu0 %106, %v61
  %v108 = vpop.permute.xlu0 %107
  %111 = vset.pattern.permute.xlu0 0
  %112 = vperm.xlu0 %111, %v62
  %v113 = vpop.permute.xlu0 %112
  %116 = vset.pattern.permute.xlu0 0
  %117 = vperm.xlu0 %116, %v63
  %v118 = vpop.permute.xlu0 %117
  %121 = vset.pattern.permute.xlu0 0
  %122 = vperm.xlu0 %121, %v64
  %v123 = vpop.permute.xlu0 %122
  %126 = vset.pattern.permute.xlu0 0
  %127 = vperm.xlu0 %126, %v65
  %v128 = vpop.permute.xlu0 %127
  %131 = vset.pattern.permute.xlu0 0
  %132 = vperm.xlu0 %131, %v66
  %v133 = vpop.permute.xlu0 %132
  %136 = vset.pattern.permute.xlu0 0
  %137 = vperm.xlu0 %136, %v67
  %v138 = vpop.permute.xlu0 %137
  %141 = vset.pattern.permute.xlu0 0
  %142 = vperm.xlu0 %141, %v68
  %v143 = vpop.permute.xlu0 %142
  %146 = vset.pattern.permute.xlu0 0
  %147 = vperm.xlu0 %146, %v69
  %v148 = vpop.permute.xlu0 %147
  %151 = vset.pattern.permute.xlu0 0
  %152 = vperm.xlu0 %151, %v70
  %v153 = vpop.permute.xlu0 %152
  %156 = vset.pattern.permute.xlu0 0
  %157 = vperm.xlu0 %156, %v71
  %v158 = vpop.permute.xlu0 %157
  %161 = vset.pattern.permute.xlu0 0
  %162 = vperm.xlu0 %161, %v72
  %v163 = vpop.permute.xlu0 %162
  %166 = vset.pattern.permute.xlu0 0
  %167 = vperm.xlu0 %166, %v73
  %v168 = vpop.permute.xlu0 %167
  %171 = vset.pattern.permute.xlu0 0
  %172 = vperm.xlu0 %171, %v74
  %v173 = vpop.permute.xlu0 %172
  %176 = vset.pattern.permute.xlu0 0
  %177 = vperm.xlu0 %176, %v75
  %v178 = vpop.permute.xlu0 %177
  %181 = vset.pattern.permute.xlu0 0
  %182 = vperm.xlu0 %181, %v76
  %v183 = vpop.permute.xlu0 %182
  %186 = vset.pattern.permute.xlu0 0
  %187 = vperm.xlu0 %186, %v77
  %v188 = vpop.permute.xlu0 %187
  %191 = vset.pattern.permute.xlu0 0
  %192 = vperm.xlu0 %191, %v78
  %v193 = vpop.permute.xlu0 %192
  %196 = vset.pattern.permute.xlu0 0
  %197 = vperm.xlu0 %196, %v79
  %v198 = vpop.permute.xlu0 %197
  %201 = vset.pattern.permute.xlu0 0
  %202 = vperm.xlu0 %201, %v80
  %v203 = vpop.permute.xlu0 %202
  %206 = vset.pattern.permute.xlu0 0
  %207 = vperm.xlu0 %206, %v81
  %v208 = vpop.permute.xlu0 %207
  %211 = vset.pattern.permute.xlu0 0
  %212 = vperm.xlu0 %211, %v82
  %v213 = vpop.permute.xlu0 %212
  %216 = vset.pattern.permute.xlu0 0
  %217 = vperm.xlu0 %216, %v83
  %v218 = vpop.permute.xlu0 %217
  %221 = vset.pattern.permute.xlu0 0
  %222 = vperm.xlu0 %221, %v84
  %v223 = vpop.permute.xlu0 %222
  %226 = vset.pattern.permute.xlu0 0
  %227 = vperm.xlu0 %226, %v85
  %v228 = vpop.permute.xlu0 %227
  %231 = vset.pattern.permute.xlu0 0
  %232 = vperm.xlu0 %231, %v86
  %v233 = vpop.permute.xlu0 %232
  %236 = vset.pattern.permute.xlu0 0
  %237 = vperm.xlu0 %236, %v87
  %v238 = vpop.permute.xlu0 %237
  %241 = vset.pattern.permute.xlu0 0
  %242 = vperm.xlu0 %241, %v88
  %v243 = vpop.permute.xlu0 %242
  %246 = vset.pattern.permute.xlu0 0
  %247 = vperm.xlu0 %246, %v89
  %v248 = vpop.permute.xlu0 %247
  %vm250 = vcmask 236544
  %v252 = vsel %vm250, %v22, 0
  %v255 = vsel %vm250, %v23, 0
  %v258 = vsel %vm250, %v24, 0
  %v261 = vsel %vm250, %v25, 0
  %v264 = vsel %vm250, %v26, 0
  %v267 = vsel %vm250, %v27, 0
  %v270 = vsel %vm250, %v28, 0
  %v273 = vsel %vm250, %v29, 0
  %v276 = vsel %vm250, %v30, 0
  %v279 = vsel %vm250, %v31, 0
  %v282 = vsel %vm250, %v32, 0
  %v285 = vsel %vm250, %v33, 0
  %v288 = vsel %vm250, %v34, 0
  %v291 = vsel %vm250, %v35, 0
  %v294 = vsel %vm250, %v36, 0
  %v297 = vsel %vm250, %v37, 0
  %v300 = vsel %vm250, %v38, 0
  %v303 = vsel %vm250, %v39, 0
  %v306 = vsel %vm250, %v40, 0
  %v309 = vsel %vm250, %v41, 0
  %v312 = vsel %vm250, %v42, 0
  %v315 = vsel %vm250, %v43, 0
  %v318 = vsel %vm250, %v44, 0
  %v321 = vsel %vm250, %v45, 0
  %v324 = vsel %vm250, %v46, 0
  %v327 = vsel %vm250, %v47, 0
  %v330 = vsel %vm250, %v48, 0
  %v333 = vsel %vm250, %v49, 0
  %v336 = vsel %vm250, %v50, 0
  %v339 = vsel %vm250, %v51, 0
  %v342 = vsel %vm250, %v52, 0
  %v345 = vsel %vm250, %v53, 0
  %vm347 = vcmask 1044480
  %v349 = vsel %vm347, %v57, 0
  %351 = vmatpush.msra.mxu0 0.0
  %352 = vmatpush.msra.mxu0 0.0
  %353 = vmatpush.msra.mxu0 0.0
  %354 = vmatpush.msra.mxu0 0.0
  %355 = vmatpush.msra.mxu0 0.0
  %356 = vmatpush.msra.mxu0 0.0
  %357 = vmatpush.msra.mxu0 0.0
  %358 = vmatpush.msra.mxu0 0.0
  %359 = vmatpush.msra.mxu0 0.0
  %360 = vmatpush.msra.mxu0 0.0
  %361 = vmatpush.msra.mxu0 0.0
  %362 = vmatpush.msra.mxu0 0.0
  %363 = vmatpush.msra.mxu0 %v349
  %364 = vmatpush.msra.mxu0 %v56
  %365 = vmatpush.msra.mxu0 %v55
  %366 = vmatpush.msra.mxu0 %v54
  %367 = vmatmul.f32.gmra.mxu0 %v252
  %v368 = vpop.f32.mrf.mxu0
  %v369 = vadd.f32 %v93, %v368
  %370 = vmatmul.f32.gmra.mxu0 %v255
  %v371 = vpop.f32.mrf.mxu0
  %v372 = vadd.f32 %v98, %v371
  %373 = vmatmul.f32.gmra.mxu0 %v258
  %v374 = vpop.f32.mrf.mxu0
  %v375 = vadd.f32 %v103, %v374
  %376 = vmatmul.f32.gmra.mxu0 %v261
  %v377 = vpop.f32.mrf.mxu0
  %v378 = vadd.f32 %v108, %v377
  %379 = vmatmul.f32.gmra.mxu0 %v264
  %v380 = vpop.f32.mrf.mxu0
  %v381 = vadd.f32 %v113, %v380
  %382 = vmatmul.f32.gmra.mxu0 %v267
  %v383 = vpop.f32.mrf.mxu0
  %v384 = vadd.f32 %v118, %v383
  %385 = vmatmul.f32.gmra.mxu0 %v270
  %v386 = vpop.f32.mrf.mxu0
  %v387 = vadd.f32 %v123, %v386
  %388 = vmatmul.f32.gmra.mxu0 %v273
  %v389 = vpop.f32.mrf.mxu0
  %v390 = vadd.f32 %v128, %v389
  %391 = vmatmul.f32.gmra.mxu0 %v276
  %v392 = vpop.f32.mrf.mxu0
  %v393 = vadd.f32 %v133, %v392
  %394 = vmatmul.f32.gmra.mxu0 %v279
  %v395 = vpop.f32.mrf.mxu0
  %v396 = vadd.f32 %v138, %v395
  %397 = vmatmul.f32.gmra.mxu0 %v282
  %v398 = vpop.f32.mrf.mxu0
  %v399 = vadd.f32 %v143, %v398
  %400 = vmatmul.f32.gmra.mxu0 %v285
  %v401 = vpop.f32.mrf.mxu0
  %v402 = vadd.f32 %v148, %v401
  %403 = vmatmul.f32.gmra.mxu0 %v288
  %v404 = vpop.f32.mrf.mxu0
  %v405 = vadd.f32 %v153, %v404
  %406 = vmatmul.f32.gmra.mxu0 %v291
  %v407 = vpop.f32.mrf.mxu0
  %v408 = vadd.f32 %v158, %v407
  %409 = vmatmul.f32.gmra.mxu0 %v294
  %v410 = vpop.f32.mrf.mxu0
  %v411 = vadd.f32 %v163, %v410
  %412 = vmatmul.f32.gmra.mxu0 %v297
  %v413 = vpop.f32.mrf.mxu0
  %v414 = vadd.f32 %v168, %v413
  %415 = vmatmul.f32.gmra.mxu0 %v300
  %v416 = vpop.f32.mrf.mxu0
  %v417 = vadd.f32 %v173, %v416
  %418 = vmatmul.f32.gmra.mxu0 %v303
  %v419 = vpop.f32.mrf.mxu0
  %v420 = vadd.f32 %v178, %v419
  %421 = vmatmul.f32.gmra.mxu0 %v306
  %v422 = vpop.f32.mrf.mxu0
  %v423 = vadd.f32 %v183, %v422
  %424 = vmatmul.f32.gmra.mxu0 %v309
  %v425 = vpop.f32.mrf.mxu0
  %v426 = vadd.f32 %v188, %v425
  %427 = vmatmul.f32.gmra.mxu0 %v312
  %v428 = vpop.f32.mrf.mxu0
  %v429 = vadd.f32 %v193, %v428
  %430 = vmatmul.f32.gmra.mxu0 %v315
  %v431 = vpop.f32.mrf.mxu0
  %v432 = vadd.f32 %v198, %v431
  %433 = vmatmul.f32.gmra.mxu0 %v318
  %v434 = vpop.f32.mrf.mxu0
  %v435 = vadd.f32 %v203, %v434
  %436 = vmatmul.f32.gmra.mxu0 %v321
  %v437 = vpop.f32.mrf.mxu0
  %v438 = vadd.f32 %v208, %v437
  %439 = vmatmul.f32.gmra.mxu0 %v324
  %v440 = vpop.f32.mrf.mxu0
  %v441 = vadd.f32 %v213, %v440
  %442 = vmatmul.f32.gmra.mxu0 %v327
  %v443 = vpop.f32.mrf.mxu0
  %v444 = vadd.f32 %v218, %v443
  %445 = vmatmul.f32.gmra.mxu0 %v330
  %v446 = vpop.f32.mrf.mxu0
  %v447 = vadd.f32 %v223, %v446
  %448 = vmatmul.f32.gmra.mxu0 %v333
  %v449 = vpop.f32.mrf.mxu0
  %v450 = vadd.f32 %v228, %v449
  %451 = vmatmul.f32.gmra.mxu0 %v336
  %v452 = vpop.f32.mrf.mxu0
  %v453 = vadd.f32 %v233, %v452
  %454 = vmatmul.f32.gmra.mxu0 %v339
  %v455 = vpop.f32.mrf.mxu0
  %v456 = vadd.f32 %v238, %v455
  %457 = vmatmul.f32.gmra.mxu0 %v342
  %v458 = vpop.f32.mrf.mxu0
  %v459 = vadd.f32 %v243, %v458
  %460 = vmatmul.f32.gmra.mxu0 %v345
  %v461 = vpop.f32.mrf.mxu0
  %v462 = vadd.f32 %v248, %v461
  %463 = vdwg.mxu0
  %v464 = vmax.f32 %v369, 0.0
  %v465 = vmax.f32 %v372, 0.0
  %v466 = vmax.f32 %v375, 0.0
  %v467 = vmax.f32 %v378, 0.0
  %v468 = vmax.f32 %v381, 0.0
  %v469 = vmax.f32 %v384, 0.0
  %v470 = vmax.f32 %v387, 0.0
  %v471 = vmax.f32 %v390, 0.0
  %v472 = vmax.f32 %v393, 0.0
  %v473 = vmax.f32 %v396, 0.0
  %v474 = vmax.f32 %v399, 0.0
  %v475 = vmax.f32 %v402, 0.0
  %v476 = vmax.f32 %v405, 0.0
  %v477 = vmax.f32 %v408, 0.0
  %v478 = vmax.f32 %v411, 0.0
  %v479 = vmax.f32 %v414, 0.0
  %v480 = vmax.f32 %v417, 0.0
  %v481 = vmax.f32 %v420, 0.0
  %v482 = vmax.f32 %v423, 0.0
  %v483 = vmax.f32 %v426, 0.0
  %v484 = vmax.f32 %v429, 0.0
  %v485 = vmax.f32 %v432, 0.0
  %v486 = vmax.f32 %v435, 0.0
  %v487 = vmax.f32 %v438, 0.0
  %v488 = vmax.f32 %v441, 0.0
  %v489 = vmax.f32 %v444, 0.0
  %v490 = vmax.f32 %v447, 0.0
  %v491 = vmax.f32 %v450, 0.0
  %v492 = vmax.f32 %v453, 0.0
  %v493 = vmax.f32 %v456, 0.0
  %v494 = vmax.f32 %v459, 0.0
  %v495 = vmax.f32 %v462, 0.0
  %v496 = vld [vmem:[%s3] sm:$0xff]
  %v497 = vld [vmem:[%s3 + $0x8] sm:$0xff]
  %v498 = vld [vmem:[%s3 + $0x10] sm:$0xff]
  %v499 = vld [vmem:[%s3 + $0x18] sm:$0xff]
  %v500 = vld [vmem:[%s3 + $0x20] sm:$0xff]
  %v501 = vld [vmem:[%s3 + $0x28] sm:$0xff]
  %v502 = vld [vmem:[%s3 + $0x30] sm:$0xff]
  %v503 = vld [vmem:[%s3 + $0x38] sm:$0xff]
  %v504 = vld [vmem:[%s3 + $0x40] sm:$0xff]
  %v505 = vld [vmem:[%s3 + $0x48] sm:$0xff]
  %v506 = vld [vmem:[%s3 + $0x50] sm:$0xff]
  %v507 = vld [vmem:[%s3 + $0x58] sm:$0xff]
  %v508 = vld [vmem:[%s3 + $0x60] sm:$0xff]
  %v509 = vld [vmem:[%s3 + $0x68] sm:$0xff]
  %v510 = vld [vmem:[%s3 + $0x70] sm:$0xff]
  %v511 = vld [vmem:[%s3 + $0x78] sm:$0xff]
  %v512 = vld [vmem:[%s3 + $0x80] sm:$0xff]
  %v513 = vld [vmem:[%s3 + $0x88] sm:$0xff]
  %v514 = vld [vmem:[%s3 + $0x90] sm:$0xff]
  %v515 = vld [vmem:[%s3 + $0x98] sm:$0xff]
  %v516 = vld [vmem:[%s3 + $0xa0] sm:$0xff]
  %v517 = vld [vmem:[%s3 + $0xa8] sm:$0xff]
  %v518 = vld [vmem:[%s3 + $0xb0] sm:$0xff]
  %v519 = vld [vmem:[%s3 + $0xb8] sm:$0xff]
  %v520 = vld [vmem:[%s3 + $0xc0] sm:$0xff]
  %v521 = vld [vmem:[%s3 + $0xc8] sm:$0xff]
  %v522 = vld [vmem:[%s3 + $0xd0] sm:$0xff]
  %v523 = vld [vmem:[%s3 + $0xd8] sm:$0xff]
  %v524 = vld [vmem:[%s3 + $0xe0] sm:$0xff]
  %v525 = vld [vmem:[%s3 + $0xe8] sm:$0xff]
  %v526 = vld [vmem:[%s3 + $0xf0] sm:$0xff]
  %v527 = vld [vmem:[%s3 + $0xf8] sm:$0xff]
  %529 = vset.pattern.permute.xlu0 0
  %530 = vperm.xlu0 %529, %v496
  %v531 = vpop.permute.xlu0 %530
  %534 = vset.pattern.permute.xlu0 0
  %535 = vperm.xlu0 %534, %v497
  %v536 = vpop.permute.xlu0 %535
  %539 = vset.pattern.permute.xlu0 0
  %540 = vperm.xlu0 %539, %v498
  %v541 = vpop.permute.xlu0 %540
  %544 = vset.pattern.permute.xlu0 0
  %545 = vperm.xlu0 %544, %v499
  %v546 = vpop.permute.xlu0 %545
  %549 = vset.pattern.permute.xlu0 0
  %550 = vperm.xlu0 %549, %v500
  %v551 = vpop.permute.xlu0 %550
  %554 = vset.pattern.permute.xlu0 0
  %555 = vperm.xlu0 %554, %v501
  %v556 = vpop.permute.xlu0 %555
  %559 = vset.pattern.permute.xlu0 0
  %560 = vperm.xlu0 %559, %v502
  %v561 = vpop.permute.xlu0 %560
  %564 = vset.pattern.permute.xlu0 0
  %565 = vperm.xlu0 %564, %v503
  %v566 = vpop.permute.xlu0 %565
  %569 = vset.pattern.permute.xlu0 0
  %570 = vperm.xlu0 %569, %v504
  %v571 = vpop.permute.xlu0 %570
  %574 = vset.pattern.permute.xlu0 0
  %575 = vperm.xlu0 %574, %v505
  %v576 = vpop.permute.xlu0 %575
  %579 = vset.pattern.permute.xlu0 0
  %580 = vperm.xlu0 %579, %v506
  %v581 = vpop.permute.xlu0 %580
  %584 = vset.pattern.permute.xlu0 0
  %585 = vperm.xlu0 %584, %v507
  %v586 = vpop.permute.xlu0 %585
  %589 = vset.pattern.permute.xlu0 0
  %590 = vperm.xlu0 %589, %v508
  %v591 = vpop.permute.xlu0 %590
  %594 = vset.pattern.permute.xlu0 0
  %595 = vperm.xlu0 %594, %v509
  %v596 = vpop.permute.xlu0 %595
  %599 = vset.pattern.permute.xlu0 0
  %600 = vperm.xlu0 %599, %v510
  %v601 = vpop.permute.xlu0 %600
  %604 = vset.pattern.permute.xlu0 0
  %605 = vperm.xlu0 %604, %v511
  %v606 = vpop.permute.xlu0 %605
  %609 = vset.pattern.permute.xlu0 0
  %610 = vperm.xlu0 %609, %v512
  %v611 = vpop.permute.xlu0 %610
  %614 = vset.pattern.permute.xlu0 0
  %615 = vperm.xlu0 %614, %v513
  %v616 = vpop.permute.xlu0 %615
  %619 = vset.pattern.permute.xlu0 0
  %620 = vperm.xlu0 %619, %v514
  %v621 = vpop.permute.xlu0 %620
  %624 = vset.pattern.permute.xlu0 0
  %625 = vperm.xlu0 %624, %v515
  %v626 = vpop.permute.xlu0 %625
  %629 = vset.pattern.permute.xlu0 0
  %630 = vperm.xlu0 %629, %v516
  %v631 = vpop.permute.xlu0 %630
  %634 = vset.pattern.permute.xlu0 0
  %635 = vperm.xlu0 %634, %v517
  %v636 = vpop.permute.xlu0 %635
  %639 = vset.pattern.permute.xlu0 0
  %640 = vperm.xlu0 %639, %v518
  %v641 = vpop.permute.xlu0 %640
  %644 = vset.pattern.permute.xlu0 0
  %645 = vperm.xlu0 %644, %v519
  %v646 = vpop.permute.xlu0 %645
  %649 = vset.pattern.permute.xlu0 0
  %650 = vperm.xlu0 %649, %v520
  %v651 = vpop.permute.xlu0 %650
  %654 = vset.pattern.permute.xlu0 0
  %655 = vperm.xlu0 %654, %v521
  %v656 = vpop.permute.xlu0 %655
  %659 = vset.pattern.permute.xlu0 0
  %660 = vperm.xlu0 %659, %v522
  %v661 = vpop.permute.xlu0 %660
  %664 = vset.pattern.permute.xlu0 0
  %665 = vperm.xlu0 %664, %v523
  %v666 = vpop.permute.xlu0 %665
  %669 = vset.pattern.permute.xlu0 0
  %670 = vperm.xlu0 %669, %v524
  %v671 = vpop.permute.xlu0 %670
  %674 = vset.pattern.permute.xlu0 0
  %675 = vperm.xlu0 %674, %v525
  %v676 = vpop.permute.xlu0 %675
  %679 = vset.pattern.permute.xlu0 0
  %680 = vperm.xlu0 %679, %v526
  %v681 = vpop.permute.xlu0 %680
  %684 = vset.pattern.permute.xlu0 0
  %685 = vperm.xlu0 %684, %v527
  %v686 = vpop.permute.xlu0 %685
  %v688 = vmul.f32 %v464, %v531
  %v689 = vmul.f32 %v465, %v536
  %v690 = vmul.f32 %v466, %v541
  %v691 = vmul.f32 %v467, %v546
  %v692 = vmul.f32 %v468, %v551
  %v693 = vmul.f32 %v469, %v556
  %v694 = vmul.f32 %v470, %v561
  %v695 = vmul.f32 %v471, %v566
  %v696 = vmul.f32 %v472, %v571
  %v697 = vmul.f32 %v473, %v576
  %v698 = vmul.f32 %v474, %v581
  %v699 = vmul.f32 %v475, %v586
  %v700 = vmul.f32 %v476, %v591
  %v701 = vmul.f32 %v477, %v596
  %v702 = vmul.f32 %v478, %v601
  %v703 = vmul.f32 %v479, %v606
  %v704 = vmul.f32 %v480, %v611
  %v705 = vmul.f32 %v481, %v616
  %v706 = vmul.f32 %v482, %v621
  %v707 = vmul.f32 %v483, %v626
  %v708 = vmul.f32 %v484, %v631
  %v709 = vmul.f32 %v485, %v636
  %v710 = vmul.f32 %v486, %v641
  %v711 = vmul.f32 %v487, %v646
  %v712 = vmul.f32 %v488, %v651
  %v713 = vmul.f32 %v489, %v656
  %v714 = vmul.f32 %v490, %v661
  %v715 = vmul.f32 %v491, %v666
  %v716 = vmul.f32 %v492, %v671
  %v717 = vmul.f32 %v493, %v676
  %v718 = vmul.f32 %v494, %v681
  %v719 = vmul.f32 %v495, %v686
  %v720 = vadd.f32 %v688, %v689
  %v721 = vadd.f32 %v720, %v690
  %v722 = vadd.f32 %v721, %v691
  %v723 = vadd.f32 %v722, %v692
  %v724 = vadd.f32 %v723, %v693
  %v725 = vadd.f32 %v724, %v694
  %v726 = vadd.f32 %v725, %v695
  %v727 = vadd.f32 %v726, %v696
  %v728 = vadd.f32 %v727, %v697
  %v729 = vadd.f32 %v728, %v698
  %v730 = vadd.f32 %v729, %v699
  %v731 = vadd.f32 %v730, %v700
  %v732 = vadd.f32 %v731, %v701
  %v733 = vadd.f32 %v732, %v702
  %v734 = vadd.f32 %v733, %v703
  %v735 = vadd.f32 %v734, %v704
  %v736 = vadd.f32 %v735, %v705
  %v737 = vadd.f32 %v736, %v706
  %v738 = vadd.f32 %v737, %v707
  %v739 = vadd.f32 %v738, %v708
  %v740 = vadd.f32 %v739, %v709
  %v741 = vadd.f32 %v740, %v710
  %v742 = vadd.f32 %v741, %v711
  %v743 = vadd.f32 %v742, %v712
  %v744 = vadd.f32 %v743, %v713
  %v745 = vadd.f32 %v744, %v714
  %v746 = vadd.f32 %v745, %v715
  %v747 = vadd.f32 %v746, %v716
  %v748 = vadd.f32 %v747, %v717
  %v749 = vadd.f32 %v748, %v718
  %v750 = vadd.f32 %v749, %v719
  %v751 = vrot.slane %v750, 4
  %v752 = vadd.f32 %v750, %v751
  %v753 = vrot.slane %v752, 2
  %v754 = vadd.f32 %v752, %v753
  %v755 = vrot.slane %v754, 1
  %v756 = vadd.f32 %v754, %v755
  %v757 = vld [vmem:[#allocation2] sm:$0x1]
  %759 = vset.pattern.permute.xlu0 0
  %760 = vperm.xlu0 %759, %v757
  %v761 = vpop.permute.xlu0 %760
  %v763 = vperm.slane %v761, 0
  %v764 = vadd.f32 %v756, %v763
  %v765 = vxor.u32 %v764, 2147483648
  %v766 = vmul.f32 %v765, 1.442695
  %v767 = vpow.pop %v766
  %v768 = vadd.f32 %v767, 1.0
  %v769 = vrcp.pop %v768
  %v770 = vmul.f32 %v768, %v769
  %v771 = vsub.f32 1.0, %v770
  %v772 = vmul.f32 %v769, %v771
  %v773 = vadd.f32 %v769, %v772
  %vm774 = vweird.f32 %v768
  %vm775 = vweird.f32 %v769
  %vm776 = vmor %vm774, %vm775
  %v777 = vsel %vm776, %v769, %v773
  %v778 = vand.u32 2147483647, %v768
  %vm779 = vcmp.eq.f32.partialorder %v778, 8.507059e+37
  %v780 = vand.u32 %v768, 2147483648
  %v781 = vor.u32 1.1754944e-38, %v780
  %v782 = vsel %vm779, %v781, %v777
  %v783 = vmul.f32 1.0, %v782
  %v784 = vmul.f32 %v783, 0.999
  %785 = vst [vmem:[%s5] sm:$0x1] %v784
  // Predicated region
  $region22: #{_measure_forward.1} parent=0 // pred_check
    _
  $region23: #{_measure_forward.1} parent=0 // pred_check_branch
    %787 = sbr.rel (0) target = $region25
  $region24: #{_measure_forward.1} parent=0 // pred_region
    _
  $region25: #{_measure_forward.1} parent=0 // pred_fallthru
    _
  // Predicated region
  $region26: #{_measure_forward.1} parent=0 // pred_check
    _
  $region27: #{_measure_forward.1} parent=0 // pred_check_branch
    %789 = sbr.rel (0) target = $region29
  $region28: #{_measure_forward.1} parent=0 // pred_region
    _
  $region29: #{_measure_forward.1} parent=0 // pred_fallthru
    _

</llo_original>
